<compile_context>
chip_gen: v6e
topology: v6e:2x2x1
jax: 0.10.0
libtpu: 0.0.40
codegen_flags: <defaults>
</compile_context>

<pallas_src>
import jax
import jax.numpy as jnp
from jax import lax
from jax.experimental import pallas as pl
from jax.experimental.pallas import tpu as pltpu

EMBED_DIM = 32            # self.embeddig_dim
HID2 = 16                 # w_uv2 output width
BN_EPS = 1e-5
D2 = 2 * EMBED_DIM        # 64 = width of the fused (user ++ item) input

# Packed parameter buffer row layout (all slice starts are 16-aligned so the
# layout is tile-friendly for both f32 and bf16 packing).
_W1_R0, _W1_R1 = 0, 2 * EMBED_DIM               # (64, 64) stage-1 block-diag weight
_W2_R0, _W2_R1 = 2 * EMBED_DIM, 4 * EMBED_DIM   # (64, 32) stage-2 fused weight
_W3_R0, _W3_R1 = 4 * EMBED_DIM, 5 * EMBED_DIM   # (32, 16) stage-3 weight
_B1_ROW = 5 * EMBED_DIM                          # 160: bias 1 (64 wide)
_B2_ROW = _B1_ROW + 16                           # 176: bias 2 (32 wide)
_B3_ROW = _B2_ROW + 16                           # 192: bias 3 (16 wide)
_WB_ROWS = _B3_ROW + 16                          # 208 rows total


def _round_up(x, m):
    return (x + m - 1) // m * m


# --------------------------------------------------------------------------- #
# Kernel
# --------------------------------------------------------------------------- #
def _gnn_reco_kernel(x_ref, wb_ref, head_ref, out_ref):
    """One batch tile: x (TILE_B, 64) -> scores written as a (1,1,TILE_B) row."""
    x = x_ref[...]                               # (TILE_B, 64), compute dtype
    cdt = x.dtype

    # Stage 1: block-diag(w_ur1*bn1, w_vr1*bn2)  -> relu
    w1 = wb_ref[_W1_R0:_W1_R1, :]                # (64, 64)
    b1 = wb_ref[_B1_ROW:_B1_ROW + 1, :]          # (1, 64)
    h = jnp.dot(x, w1, preferred_element_type=jnp.float32) + b1
    h = jnp.maximum(h, 0.0).astype(cdt)          # (TILE_B, 64) == [h_u, h_v]

    # Stage 2: [w_ur2@w_uv1_u ; w_vr2@w_uv1_v] * bn3  -> relu
    w2 = wb_ref[_W2_R0:_W2_R1, 0:EMBED_DIM]      # (64, 32)
    b2 = wb_ref[_B2_ROW:_B2_ROW + 1, 0:EMBED_DIM]
    h = jnp.dot(h, w2, preferred_element_type=jnp.float32) + b2
    h = jnp.maximum(h, 0.0).astype(cdt)          # (TILE_B, 32)

    # Stage 3: w_uv2 * bn4 -> relu
    w3 = wb_ref[_W3_R0:_W3_R1, 0:HID2]           # (32, 16)
    b3 = wb_ref[_B3_ROW:_B3_ROW + 1, 0:HID2]
    h = jnp.dot(h, w3, preferred_element_type=jnp.float32) + b3
    h = jnp.maximum(h, 0.0)                      # (TILE_B, 16) f32

    # Stage 4 (head, f32): scores^T = w_uv3^T @ p^T  -> lane-dense (1, TILE_B)
    w4t = head_ref[0:1, :]                       # (1, 16)
    b4 = head_ref[1:2, 0:1]                      # (1, 1)
    score = lax.dot_general(
        w4t, h, (((1,), (1,)), ((), ())),
        preferred_element_type=jnp.float32)      # (1, TILE_B)
    out_ref[...] = jnp.reshape(score + b4, (1, 1, score.shape[1]))


# --------------------------------------------------------------------------- #
# Wrapper
# --------------------------------------------------------------------------- #
def gnn_reco_forward(u_latent, v_latent, packed, *, tile_b=2048):
    """Fused recommendation-MLP forward. Returns (B,) scores (f32)."""
    wb, head = packed["wb"], packed["head"]
    cdt = wb.dtype
    B = u_latent.shape[0]

    # One lane-dense input stream: x = [u_latent, v_latent] (B, 64).
    x = jnp.concatenate([u_latent, v_latent], axis=1).astype(cdt)

    # Tile the batch. Sublane granule: 8 rows for f32, 16 for bf16.
    sub = 16 if cdt == jnp.bfloat16 else 8
    tb = max(sub, min(int(tile_b), _round_up(B, sub)))
    tb = _round_up(tb, sub)
    b_pad = _round_up(B, tb)
    if b_pad != B:
        x = jnp.pad(x, ((0, b_pad - B), (0, 0)))
    n_tiles = b_pad // tb

    out = pl.pallas_call(
        _gnn_reco_kernel,
        out_shape=jax.ShapeDtypeStruct((n_tiles, 1, tb), jnp.float32),
        grid=(n_tiles,),
        in_specs=[
            pl.BlockSpec((tb, D2), lambda i: (i, 0)),          # batch tile of x
            pl.BlockSpec(wb.shape, lambda i: (0, 0)),          # VMEM-resident params
            pl.BlockSpec(head.shape, lambda i: (0, 0)),        # VMEM-resident head
        ],
        out_specs=pl.BlockSpec((1, 1, tb), lambda i: (i, 0, 0)),
        compiler_params=pltpu.CompilerParams(
            dimension_semantics=("parallel",)),
    )(x, wb, head)

    return out.reshape(-1)[:B]                                  # .squeeze() -> (B,)


# --------------------------------------------------------------------------- #
# Parameter construction / folding
# --------------------------------------------------------------------------- #
def make_raw_params(key):
    """'PyTorch-like' raw parameters. Linear weights are stored pre-transposed
    as (in_features, out_features) so y = x @ W + b matches nn.Linear."""
    D, H2 = EMBED_DIM, HID2
    ks = iter(jax.random.split(key, 40))

    def lin(in_f, out_f):
        bound = 1.0 / (in_f ** 0.5)
        w = jax.random.uniform(next(ks), (in_f, out_f), jnp.float32, -bound, bound)
        b = jax.random.uniform(next(ks), (out_f,), jnp.float32, -bound, bound)
        return w, b

    def bn(feat):
        gamma = 1.0 + 0.1 * jax.random.normal(next(ks), (feat,), jnp.float32)
        beta = 0.1 * jax.random.normal(next(ks), (feat,), jnp.float32)
        mean = 0.05 * jax.random.normal(next(ks), (feat,), jnp.float32)
        var = 0.5 + jnp.abs(jax.random.normal(next(ks), (feat,), jnp.float32))
        return (gamma, beta, mean, var)

    p = {}
    p["w_ur1"], p["b_ur1"] = lin(D, D)
    p["w_ur2"], p["b_ur2"] = lin(D, D)
    p["w_vr1"], p["b_vr1"] = lin(D, D)
    p["w_vr2"], p["b_vr2"] = lin(D, D)
    p["w_uv1"], p["b_uv1"] = lin(2 * D, D)
    p["w_uv2"], p["b_uv2"] = lin(D, H2)
    p["w_uv3"], p["b_uv3"] = lin(H2, 1)
    p["bn1"], p["bn2"], p["bn3"] = bn(D), bn(D), bn(D)
    p["bn4"] = bn(H2)
    return p


def fold_params(rp, compute_dtype=jnp.float32):
    """Fold eval-mode BN into the linears, fuse the bias-only linear chain
    (w_ur2->w_uv1_u, w_vr2->w_uv1_v), and pack everything into one VMEM buffer."""
    D, H2 = EMBED_DIM, HID2

    def bn_scale_shift(stats):
        g, b, m, v = stats
        s = g / jnp.sqrt(v + BN_EPS)
        return s, b - m * s

    s1, t1 = bn_scale_shift(rp["bn1"])
    s2, t2 = bn_scale_shift(rp["bn2"])
    s3, t3 = bn_scale_shift(rp["bn3"])
    s4, t4 = bn_scale_shift(rp["bn4"])

    # Stage 1: block-diagonal weight over the concatenated [u, v] input.
    w1 = jnp.zeros((2 * D, 2 * D), jnp.float32)
    w1 = w1.at[:D, :D].set(rp["w_ur1"] * s1)
    w1 = w1.at[D:, D:].set(rp["w_vr1"] * s2)
    b1 = jnp.concatenate([rp["b_ur1"] * s1 + t1, rp["b_vr1"] * s2 + t2])

    # Stage 2: fold w_ur2/w_vr2 into the split halves of w_uv1 (+ BN3).
    wu, wv = rp["w_uv1"][:D], rp["w_uv1"][D:]
    w2 = jnp.concatenate([rp["w_ur2"] @ wu, rp["w_vr2"] @ wv], axis=0) * s3
    b2 = (rp["b_ur2"] @ wu + rp["b_vr2"] @ wv + rp["b_uv1"]) * s3 + t3

    # Stage 3: w_uv2 (+ BN4).
    w3 = rp["w_uv2"] * s4
    b3 = rp["b_uv2"] * s4 + t4

    wb = jnp.zeros((_WB_ROWS, 2 * D), jnp.float32)
    wb = wb.at[_W1_R0:_W1_R1, :].set(w1)
    wb = wb.at[_W2_R0:_W2_R1, 0:D].set(w2)
    wb = wb.at[_W3_R0:_W3_R1, 0:H2].set(w3)
    wb = wb.at[_B1_ROW, :].set(b1)
    wb = wb.at[_B2_ROW, 0:D].set(b2)
    wb = wb.at[_B3_ROW, 0:H2].set(b3)
    wb = wb.astype(compute_dtype)

    head = jnp.zeros((2, H2), jnp.float32)           # head always f32
    head = head.at[0, :].set(rp["w_uv3"][:, 0])
    head = head.at[1, 0].set(rp["b_uv3"][0])
    return {"wb": wb, "head": head}


# --------------------------------------------------------------------------- #
# Plain-JAX mirror of the (unfolded) PyTorch eval forward, for validation.
# --------------------------------------------------------------------------- #
def reference_forward(u, v, rp):
    def bn(x, stats):
        g, b, m, var = stats
        return (x - m) * (g / jnp.sqrt(var + BN_EPS)) + b

    h_u = jnp.maximum(bn(u @ rp["w_ur1"] + rp["b_ur1"], rp["bn1"]), 0.0)
    uu = h_u @ rp["w_ur2"] + rp["b_ur2"]
    h_v = jnp.maximum(bn(v @ rp["w_vr1"] + rp["b_vr1"], rp["bn2"]), 0.0)
    vv = h_v @ rp["w_vr2"] + rp["b_vr2"]
    q = jnp.maximum(bn(jnp.concatenate([uu, vv], axis=1) @ rp["w_uv1"]
                       + rp["b_uv1"], rp["bn3"]), 0.0)
    r = jnp.maximum(bn(q @ rp["w_uv2"] + rp["b_uv2"], rp["bn4"]), 0.0)
    return (r @ rp["w_uv3"] + rp["b_uv3"])[:, 0]


# --------------------------------------------------------------------------- #
if __name__ == "__main__":
    key = jax.random.PRNGKey(0)
    k_param, k_uemb, k_vemb, k_nu, k_nv = jax.random.split(key, 5)

    B = 512
    NUM_USERS, NUM_ITEMS = 64, 96
    D = EMBED_DIM

    raw = make_raw_params(k_param)

    # TODO(synk): user_user_updater / item_updater are external graph-aggregation
    # modules; they are modelled here as embedding-table lookups that produce the
    # (B, D) latent factors consumed by the scoring MLP (kept outside the kernel).
    user_table = 0.5 * jax.random.normal(k_uemb, (NUM_USERS, D), jnp.float32)
    item_table = 0.5 * jax.random.normal(k_vemb, (NUM_ITEMS, D), jnp.float32)
    nodes_u = jax.random.randint(k_nu, (B,), 0, NUM_USERS)
    nodes_v = jax.random.randint(k_nv, (B,), 0, NUM_ITEMS)
    u_latent = user_table[nodes_u]                   # (B, D)
    v_latent = item_table[nodes_v]                   # (B, D)

    ref = reference_forward(u_latent, v_latent, raw)

    # f32 path: exact up to float reassociation introduced by the constant folds.
    packed_f32 = fold_params(raw, jnp.float32)
    scores = gnn_reco_forward(u_latent, v_latent, packed_f32, tile_b=128)
    scores = jax.block_until_ready(scores)
    assert scores.shape == (B,)
    err = float(jnp.max(jnp.abs(scores - ref)))
    assert err < 1e-4, f"f32 kernel mismatch: max|diff|={err}"

    # bf16 path: halves HBM traffic (op is bandwidth-bound); MXU accumulates f32.
    packed_bf16 = fold_params(raw, jnp.bfloat16)
    scores_bf16 = gnn_reco_forward(u_latent, v_latent, packed_bf16, tile_b=128)
    scores_bf16 = jax.block_until_ready(scores_bf16)
    err_bf16 = float(jnp.max(jnp.abs(scores_bf16 - ref)))
    assert err_bf16 < 5e-2, f"bf16 kernel mismatch: max|diff|={err_bf16}"

    print("KERNEL_OK")
</pallas_src>

<mosaic_0001>
module attributes {stable_mosaic.version = 11 : i64} {
  func.func @_gnn_reco_kernel(%arg0: i32, %arg1: memref<128x64xf32, #tpu.memory_space<vmem>>, %arg2: memref<208x64xf32, #tpu.memory_space<vmem>>, %arg3: memref<2x16xf32, #tpu.memory_space<vmem>>, %arg4: memref<1x1x128xf32, #tpu.memory_space<vmem>>) attributes {dimension_semantics = [#tpu.dimension_semantics<parallel>], iteration_bounds = array<i64: 4>, scalar_prefetch = 0 : i64, scratch_operands = 0 : i64, tpu.core_type = #tpu.core_type<tc>, window_params = [{transform_indices = @transform_0, window_bounds = array<i64: 128, 64>}, {pipeline_mode = #tpu.pipeline_mode<synchronous>, transform_indices = @transform_1, window_bounds = array<i64: 208, 64>}, {pipeline_mode = #tpu.pipeline_mode<synchronous>, transform_indices = @transform_2, window_bounds = array<i64: 2, 16>}, {transform_indices = @transform_3, window_bounds = array<i64: 1, 1, 128>}]} {
    %c0 = arith.constant 0 : index
    %c0_0 = arith.constant 0 : index
    %0 = vector.load %arg1[%c0, %c0_0] : memref<128x64xf32, #tpu.memory_space<vmem>>, vector<128x64xf32>
    %c0_1 = arith.constant 0 : index
    %c0_2 = arith.constant 0 : index
    %1 = vector.load %arg2[%c0_1, %c0_2] : memref<208x64xf32, #tpu.memory_space<vmem>>, vector<64x64xf32>
    %c160 = arith.constant 160 : index
    %c0_3 = arith.constant 0 : index
    %2 = vector.load %arg2[%c160, %c0_3] : memref<208x64xf32, #tpu.memory_space<vmem>>, vector<1x64xf32>
    %cst = arith.constant dense<0.000000e+00> : vector<128x64xf32>
    %3 = tpu.matmul %0, %1, %cst {dimension_numbers = #tpu.dot_dimension_numbers<[1], [0], [0], [1], [0, 0, 1, 1], [], []>} : vector<128x64xf32>, vector<64x64xf32>, vector<128x64xf32> -> vector<128x64xf32>
    %4 = vector.broadcast %2 : vector<1x64xf32> to vector<128x64xf32>
    %5 = arith.addf %3, %4 : vector<128x64xf32>
    %cst_4 = arith.constant 0.000000e+00 : f32
    %6 = vector.broadcast %cst_4 : f32 to vector<128x64xf32>
    %7 = arith.maximumf %5, %6 : vector<128x64xf32>
    %c64 = arith.constant 64 : index
    %c0_5 = arith.constant 0 : index
    %8 = vector.load %arg2[%c64, %c0_5] : memref<208x64xf32, #tpu.memory_space<vmem>>, vector<64x32xf32>
    %c176 = arith.constant 176 : index
    %c0_6 = arith.constant 0 : index
    %9 = vector.load %arg2[%c176, %c0_6] : memref<208x64xf32, #tpu.memory_space<vmem>>, vector<1x32xf32>
    %cst_7 = arith.constant dense<0.000000e+00> : vector<128x32xf32>
    %10 = tpu.matmul %7, %8, %cst_7 {dimension_numbers = #tpu.dot_dimension_numbers<[1], [0], [0], [1], [0, 0, 1, 1], [], []>} : vector<128x64xf32>, vector<64x32xf32>, vector<128x32xf32> -> vector<128x32xf32>
    %11 = vector.broadcast %9 : vector<1x32xf32> to vector<128x32xf32>
    %12 = arith.addf %10, %11 : vector<128x32xf32>
    %cst_8 = arith.constant 0.000000e+00 : f32
    %13 = vector.broadcast %cst_8 : f32 to vector<128x32xf32>
    %14 = arith.maximumf %12, %13 : vector<128x32xf32>
    %c128 = arith.constant 128 : index
    %c0_9 = arith.constant 0 : index
    %15 = vector.load %arg2[%c128, %c0_9] : memref<208x64xf32, #tpu.memory_space<vmem>>, vector<32x16xf32>
    %c192 = arith.constant 192 : index
    %c0_10 = arith.constant 0 : index
    %16 = vector.load %arg2[%c192, %c0_10] : memref<208x64xf32, #tpu.memory_space<vmem>>, vector<1x16xf32>
    %cst_11 = arith.constant dense<0.000000e+00> : vector<128x16xf32>
    %17 = tpu.matmul %14, %15, %cst_11 {dimension_numbers = #tpu.dot_dimension_numbers<[1], [0], [0], [1], [0, 0, 1, 1], [], []>} : vector<128x32xf32>, vector<32x16xf32>, vector<128x16xf32> -> vector<128x16xf32>
    %18 = vector.broadcast %16 : vector<1x16xf32> to vector<128x16xf32>
    %19 = arith.addf %17, %18 : vector<128x16xf32>
    %cst_12 = arith.constant 0.000000e+00 : f32
    %20 = vector.broadcast %cst_12 : f32 to vector<128x16xf32>
    %21 = arith.maximumf %19, %20 : vector<128x16xf32>
    %c0_13 = arith.constant 0 : index
    %c0_14 = arith.constant 0 : index
    %22 = vector.load %arg3[%c0_13, %c0_14] : memref<2x16xf32, #tpu.memory_space<vmem>>, vector<1x16xf32>
    %c1 = arith.constant 1 : index
    %c0_15 = arith.constant 0 : index
    %23 = vector.load %arg3[%c1, %c0_15] : memref<2x16xf32, #tpu.memory_space<vmem>>, vector<1x1xf32>
    %cst_16 = arith.constant dense<0.000000e+00> : vector<1x128xf32>
    %24 = tpu.matmul %22, %21, %cst_16 {dimension_numbers = #tpu.dot_dimension_numbers<[1], [1], [0], [0], [0, 0, 1, 0], [], []>} : vector<1x16xf32>, vector<128x16xf32>, vector<1x128xf32> -> vector<1x128xf32>
    %25 = vector.broadcast %23 : vector<1x1xf32> to vector<1x128xf32>
    %26 = arith.addf %24, %25 : vector<1x128xf32>
    %27 = vector.shape_cast %26 : vector<1x128xf32> to vector<1x1x128xf32>
    %c0_17 = arith.constant 0 : index
    %c0_18 = arith.constant 0 : index
    %c0_19 = arith.constant 0 : index
    %28 = vector.load %arg4[%c0_17, %c0_18, %c0_19] : memref<1x1x128xf32, #tpu.memory_space<vmem>>, vector<1x1x128xf32>
    tpu.vector_store %arg4[%c0_17, %c0_18, %c0_19], %27 {strides = array<i32>} : memref<1x1x128xf32, #tpu.memory_space<vmem>>, vector<1x1x128xf32>,
    return
  }
  func.func @transform_0(%arg0: i32) -> (i32, i32) {
    %c0_i32 = arith.constant 0 : i32
    %c0_i32_0 = arith.constant 0 : i32
    return %arg0, %c0_i32 : i32, i32
  }
  func.func @transform_1(%arg0: i32) -> (i32, i32) {
    %c0_i32 = arith.constant 0 : i32
    %c0_i32_0 = arith.constant 0 : i32
    %c0_i32_1 = arith.constant 0 : i32
    return %c0_i32, %c0_i32_0 : i32, i32
  }
  func.func @transform_2(%arg0: i32) -> (i32, i32) {
    %c0_i32 = arith.constant 0 : i32
    %c0_i32_0 = arith.constant 0 : i32
    %c0_i32_1 = arith.constant 0 : i32
    return %c0_i32, %c0_i32_0 : i32, i32
  }
  func.func @transform_3(%arg0: i32) -> (i32, i32, i32) {
    %c0_i32 = arith.constant 0 : i32
    %c0_i32_0 = arith.constant 0 : i32
    %c0_i32_1 = arith.constant 0 : i32
    return %arg0, %c0_i32, %c0_i32_0 : i32, i32, i32
  }
}

</mosaic_0001>

<llo_original>
// kernel: tpu_custom_call.1
$region0: #{tpu_custom_call.1}
  #allocation0 [shape = 'u32[]', space=smem, size = 0x4, offset = 0x4, fixed_abs, tag = 'smem constant byte address 0x4 - core index']
  #allocation1 [shape = 'u32[144,128]{1,0:T(1,128)}', space=vmem, size = 0x12000, scoped, tag = 'internal scratch']
  %s0 = inlined_call_operand.vmem [shape: f32[512,64], index: 0, kind: input, shape index: {}]
  %s1 = inlined_call_operand.vmem [shape: f32[208,64], index: 1, kind: input, shape index: {}]
  %s2 = inlined_call_operand.vmem [shape: f32[2,16], index: 2, kind: input, shape index: {}]
  %s3 = inlined_call_operand.hbm [shape: f32[4,1,128], index: 3, kind: output, shape index: {}]
  %s4 = sld [smem:[#allocation0]]
  $region45: #{tpu_custom_call.1} parent=0
    _
  %s6 = ssub.s32 1, %s4
  %s7 = scalar_select 0, %s6, %s4
  $region1: #{tpu_custom_call.1} parent=0
    #allocation2 [shape = 'u8[1024]{0}', space=vmem, size = 0x400, scoped, tag = 'output window, operand 0']
    #allocation3 [shape = 's32[2]{0}', space=sflag, size = 0x8, scoped, tag = 'scoped memory for tpu_custom_call.1']
    %8 = vsyncpa [#allocation3], 0
    %s9 = scalar_lea.sflag [#allocation3], 1
    %10 = vsyncpa %s9, 0
    loop: start=0, step=1, limit=6
    $region2: #{tpu_custom_call.1} parent=1 // loop_pre_header
      _
    $region3: #{tpu_custom_call.1} parent=1 // loop_header
      %s12 = sphi 0, %s16
      %p13 = scmp.ge.s32.totalorder %s12, 6
      %s22 = sphi 0, %s24
      %s25 = sphi 0, %s22
      %s26 = sphi 0, %s25
      %s42 = sphi 0, %s26
      %s46 = sphi 0, %s46
      %s48 = sphi 0, %s46
      %s49 = sphi 0, %s48
      %s63 = sphi 0, %s49
      %s67 = sphi 0, %s67
      %s69 = sphi 0, %s67
      %s70 = sphi 0, %s69
      %s84 = sphi 0, %s70
      %s90 = sphi 0, %s92
      %s93 = sphi 0, %s90
      %s94 = sphi 0, %s93
      %s110 = sphi 0, %s94
    $region4: #{tpu_custom_call.1} parent=1 // loop_header_branch
      %15 = sbr.rel (%p13) target = $region8
    $region5: #{tpu_custom_call.1} parent=1 // loop_body
      %s17 = ssub.s32 %s12, 1
      %s18 = ssub.s32 %s12, 2
      %s19 = sadd.s32 %s12, 1
      %s20 = ssub.s32 %s12, %s19
      %p21 = scmp.eq.s32.totalorder %s20, 0
      %s23 = sadd.s32 %s22, 1
      %s24 = scalar_select %p21, %s22, %s23
      %p27 = pneg %p21
      %p28 = scmp.eq.s32.totalorder %s12, 3
      %p29 = por %p27, %p28
      %p30 = scmp.ne.s32.totalorder %s22, %s25
      %p31 = scmp.eq.s32.totalorder %s12, 0
      %p32 = por %p30, %p31
      %p33 = scmp.ne.s32.totalorder %s22, %s25
      %p34 = scmp.eq.s32.totalorder %s17, 3
      %p35 = por %p33, %p34
      %p36 = scmp.ne.s32.totalorder %s25, %s26
      %p37 = scmp.eq.s32.totalorder %s17, 0
      %p38 = por %p36, %p37
      %p39 = scmp.ne.s32.totalorder %s25, %s26
      %p40 = scmp.eq.s32.totalorder %s18, 3
      %p41 = por %p39, %p40
      %p43 = scmp.ne.s32.totalorder %s26, %s42
      %p44 = scmp.eq.s32.totalorder %s18, 0
      %p45 = por %p43, %p44
      %s47 = sadd.s32 %s46, 1
      %p50 = scmp.eq.s32.totalorder %s12, 3
      %p51 = scmp.ne.s32.totalorder %s46, %s48
      %p52 = scmp.eq.s32.totalorder %s12, 0
      %p53 = por %p51, %p52
      %p54 = scmp.ne.s32.totalorder %s46, %s48
      %p55 = scmp.eq.s32.totalorder %s17, 3
      %p56 = por %p54, %p55
      %p57 = scmp.ne.s32.totalorder %s48, %s49
      %p58 = scmp.eq.s32.totalorder %s17, 0
      %p59 = por %p57, %p58
      %p60 = scmp.ne.s32.totalorder %s48, %s49
      %p61 = scmp.eq.s32.totalorder %s18, 3
      %p62 = por %p60, %p61
      %p64 = scmp.ne.s32.totalorder %s49, %s63
      %p65 = scmp.eq.s32.totalorder %s18, 0
      %p66 = por %p64, %p65
      %s68 = sadd.s32 %s67, 1
      %p71 = scmp.eq.s32.totalorder %s12, 3
      %p72 = scmp.ne.s32.totalorder %s67, %s69
      %p73 = scmp.eq.s32.totalorder %s12, 0
      %p74 = por %p72, %p73
      %p75 = scmp.ne.s32.totalorder %s67, %s69
      %p76 = scmp.eq.s32.totalorder %s17, 3
      %p77 = por %p75, %p76
      %p78 = scmp.ne.s32.totalorder %s69, %s70
      %p79 = scmp.eq.s32.totalorder %s17, 0
      %p80 = por %p78, %p79
      %p81 = scmp.ne.s32.totalorder %s69, %s70
      %p82 = scmp.eq.s32.totalorder %s18, 3
      %p83 = por %p81, %p82
      %p85 = scmp.ne.s32.totalorder %s70, %s84
      %p86 = scmp.eq.s32.totalorder %s18, 0
      %p87 = por %p85, %p86
      %s88 = ssub.s32 %s12, %s19
      %p89 = scmp.eq.s32.totalorder %s88, 0
      %s91 = sadd.s32 %s90, 1
      %s92 = scalar_select %p89, %s90, %s91
      %p95 = pneg %p89
      %p96 = scmp.eq.s32.totalorder %s12, 3
      %p97 = por %p95, %p96
      %p98 = scmp.ne.s32.totalorder %s90, %s93
      %p99 = scmp.eq.s32.totalorder %s12, 0
      %p100 = por %p98, %p99
      %p101 = scmp.ne.s32.totalorder %s90, %s93
      %p102 = scmp.eq.s32.totalorder %s17, 3
      %p103 = por %p101, %p102
      %p104 = scmp.ne.s32.totalorder %s93, %s94
      %p105 = scmp.eq.s32.totalorder %s17, 0
      %p106 = por %p104, %p105
      %p107 = scmp.ne.s32.totalorder %s93, %s94
      %p108 = scmp.eq.s32.totalorder %s18, 3
      %p109 = por %p107, %p108
      %p111 = scmp.ne.s32.totalorder %s94, %s110
      %p112 = scmp.eq.s32.totalorder %s18, 0
      %p113 = por %p111, %p112
      %p114 = scmp.le.s32.totalorder 1, %s12
      %p115 = scmp.lt.s32.totalorder %s12, 5
      %p116 = pnand %p114, %p115
      %p117 = pneg %p116
      // Predicated region
      $region9: #{tpu_custom_call.1} parent=5 // pred_check
        _
      $region10: #{tpu_custom_call.1} parent=5 // pred_check_branch
        %119 = sbr.rel (%p116) target = $region12
      $region11: #{tpu_custom_call.1} parent=5 // pred_region
        %s120 = ssub.s32 %s12, 1
        // Predicated region
        $region13: #{tpu_custom_call.1} parent=11 // pred_check
          %p121 = pneg %p59
        $region14: #{tpu_custom_call.1} parent=11 // pred_check_branch
          %123 = sbr.rel (%p121) target = $region16
        $region15: #{tpu_custom_call.1} parent=11 // pred_region
          _
        $region16: #{tpu_custom_call.1} parent=11 // pred_fallthru
          _
        // Predicated region
        $region17: #{tpu_custom_call.1} parent=11 // pred_check
          %p124 = pneg %p80
        $region18: #{tpu_custom_call.1} parent=11 // pred_check_branch
          %126 = sbr.rel (%p124) target = $region20
        $region19: #{tpu_custom_call.1} parent=11 // pred_region
          _
        $region20: #{tpu_custom_call.1} parent=11 // pred_fallthru
          _
      $region12: #{tpu_custom_call.1} parent=5 // pred_fallthru
        _
      %p127 = scmp.lt.s32.totalorder %s12, 4
      // Predicated region
      $region21: #{tpu_custom_call.1} parent=5 // pred_check
        %p128 = pneg %p127
      $region22: #{tpu_custom_call.1} parent=5 // pred_check_branch
        %130 = sbr.rel (%p128) target = $region24
      $region23: #{tpu_custom_call.1} parent=5 // pred_region
        // Predicated region
        $region25: #{tpu_custom_call.1} parent=23 // pred_check
          %p131 = pneg %p32
        $region26: #{tpu_custom_call.1} parent=23 // pred_check_branch
          %133 = sbr.rel (%p131) target = $region28
        $region27: #{tpu_custom_call.1} parent=23 // pred_region
          %s134 = smul.u32 16, %s12
          %p135 = scmp.lt.s32.totalorder %s134, 63
          %s136 = scalar_select %p135, %s134, 63
          %s137 = smul.addr %s136, 8
          %s138 = scalar_lea.vmem %s0, %s137
          %s139 = smul.u32 16, %s12
        $region28: #{tpu_custom_call.1} parent=23 // pred_fallthru
          _
      $region24: #{tpu_custom_call.1} parent=5 // pred_fallthru
        _
      %p140 = scmp.le.s32.totalorder 1, %s12
      %p141 = scmp.lt.s32.totalorder %s12, 5
      %p142 = pnand %p140, %p141
      %p143 = pneg %p142
      // Predicated region
      $region29: #{tpu_custom_call.1} parent=5 // pred_check
        _
      $region30: #{tpu_custom_call.1} parent=5 // pred_check_branch
        %145 = sbr.rel (%p142) target = $region32
      $region31: #{tpu_custom_call.1} parent=5 // pred_region
        %s146 = ssub.s32 %s12, 1
        %s147 = smul.u32 16, %s17
        %p148 = scmp.lt.s32.totalorder %s147, 63
        %s149 = scalar_select %p148, %s147, 63
        %s150 = smul.addr %s149, 8
        %s151 = scalar_lea.vmem %s0, %s150
        %p152 = pneg %p38
        %p153 = pneg %p35
        %p154 = pneg %p59
        %p155 = pneg %p56
        %p156 = pneg %p80
        %p157 = pneg %p77
        %p158 = pneg %p106
        %p159 = pneg %p103
        %s160 = sand.u32 %s93, 1
        %s161 = scalar_lea.sflag [#allocation3], %s160
        %s162 = sand.u32 %s93, 1
        %s163 = scalar_lea.vmem [#allocation2], %s162
        %s164 = smul.u32 16, %s17
        %p165 = scmp.lt.s32.totalorder %s164, 63
        %s166 = scalar_select %p165, %s164, 63
        %s167 = smul.addr %s166, 8
        %s168 = scalar_lea.vmem %s0, %s167
        %s169 = smul.u32 16, %s17
        %v170 = vld [vmem:[%s168] sm:$0xff]
        %v171 = vld [vmem:[%s168 + $0x8] sm:$0xff]
        %v172 = vld [vmem:[%s168 + $0x10] sm:$0xff]
        %v173 = vld [vmem:[%s168 + $0x18] sm:$0xff]
        %v174 = vld [vmem:[%s168 + $0x20] sm:$0xff]
        %v175 = vld [vmem:[%s168 + $0x28] sm:$0xff]
        %v176 = vld [vmem:[%s168 + $0x30] sm:$0xff]
        %v177 = vld [vmem:[%s168 + $0x38] sm:$0xff]
        %v178 = vld [vmem:[%s168 + $0x40] sm:$0xff]
        %v179 = vld [vmem:[%s168 + $0x48] sm:$0xff]
        %v180 = vld [vmem:[%s168 + $0x50] sm:$0xff]
        %v181 = vld [vmem:[%s168 + $0x58] sm:$0xff]
        %v182 = vld [vmem:[%s168 + $0x60] sm:$0xff]
        %v183 = vld [vmem:[%s168 + $0x68] sm:$0xff]
        %v184 = vld [vmem:[%s168 + $0x70] sm:$0xff]
        %v185 = vld [vmem:[%s168 + $0x78] sm:$0xff]
        %v186 = vld [vmem:[%s1] sm:$0xff]
        %v187 = vld [vmem:[%s1 + $0x8] sm:$0xff]
        %v188 = vld [vmem:[%s1 + $0x10] sm:$0xff]
        %v189 = vld [vmem:[%s1 + $0x18] sm:$0xff]
        %v190 = vld [vmem:[%s1 + $0x20] sm:$0xff]
        %v191 = vld [vmem:[%s1 + $0x28] sm:$0xff]
        %v192 = vld [vmem:[%s1 + $0x30] sm:$0xff]
        %v193 = vld [vmem:[%s1 + $0x38] sm:$0xff]
        %v194 = vld [vmem:[%s1 + $0xa0] sm:$0x1]
        %v195 = vlaneseq
        %v196 = vshrl.u32 %v195, 7
        %v197 = vsub.s32 0, %v196
        %v198 = vrot.slane %v194, %v197
        %vm199 = vcmask 523264
        %v201 = vsel %vm199, %v170, 0
        %v204 = vsel %vm199, %v171, 0
        %v207 = vsel %vm199, %v172, 0
        %v210 = vsel %vm199, %v173, 0
        %v213 = vsel %vm199, %v174, 0
        %v216 = vsel %vm199, %v175, 0
        %v219 = vsel %vm199, %v176, 0
        %v222 = vsel %vm199, %v177, 0
        %v225 = vsel %vm199, %v178, 0
        %v228 = vsel %vm199, %v179, 0
        %v231 = vsel %vm199, %v180, 0
        %v234 = vsel %vm199, %v181, 0
        %v237 = vsel %vm199, %v182, 0
        %v240 = vsel %vm199, %v183, 0
        %v243 = vsel %vm199, %v184, 0
        %v246 = vsel %vm199, %v185, 0
        %248 = vmatprep.subr.mxu0 0.0
        %249 = vmatpush1.msra.mxu0 0.0
        %250 = vmatprep.subr.mxu0 0.0
        %251 = vmatpush1.msra.mxu0 0.0
        %252 = vmatprep.subr.mxu0 0.0
        %253 = vmatpush1.msra.mxu0 0.0
        %254 = vmatprep.subr.mxu0 0.0
        %255 = vmatpush1.msra.mxu0 0.0
        %256 = vmatprep.subr.mxu0 0.0
        %257 = vmatpush1.msra.mxu0 0.0
        %258 = vmatprep.subr.mxu0 0.0
        %259 = vmatpush1.msra.mxu0 0.0
        %260 = vmatprep.subr.mxu0 0.0
        %261 = vmatpush1.msra.mxu0 0.0
        %262 = vmatprep.subr.mxu0 0.0
        %263 = vmatpush1.msra.mxu0 0.0
        %264 = vmatprep.subr.mxu0 0.0
        %265 = vmatpush1.msra.mxu0 %v193
        %266 = vmatprep.subr.mxu0 0.0
        %267 = vmatpush1.msra.mxu0 %v192
        %268 = vmatprep.subr.mxu0 0.0
        %269 = vmatpush1.msra.mxu0 %v191
        %270 = vmatprep.subr.mxu0 0.0
        %271 = vmatpush1.msra.mxu0 %v190
        %272 = vmatprep.subr.mxu0 0.0
        %273 = vmatpush1.msra.mxu0 %v189
        %274 = vmatprep.subr.mxu0 0.0
        %275 = vmatpush1.msra.mxu0 %v188
        %276 = vmatprep.subr.mxu0 0.0
        %277 = vmatpush1.msra.mxu0 %v187
        %278 = vmatprep.subr.mxu0 0.0
        %279 = vmatpush1.msra.mxu0 %v186
        %280 = vmatprep.subr.mxu0 0.0
        %281 = vmatpush2.msra.mxu0 0.0
        %282 = vmatprep.subr.mxu0 0.0
        %283 = vmatpush2.msra.mxu0 0.0
        %284 = vmatprep.subr.mxu0 0.0
        %285 = vmatpush2.msra.mxu0 0.0
        %286 = vmatprep.subr.mxu0 0.0
        %287 = vmatpush2.msra.mxu0 0.0
        %288 = vmatprep.subr.mxu0 0.0
        %289 = vmatpush2.msra.mxu0 0.0
        %290 = vmatprep.subr.mxu0 0.0
        %291 = vmatpush2.msra.mxu0 0.0
        %292 = vmatprep.subr.mxu0 0.0
        %293 = vmatpush2.msra.mxu0 0.0
        %294 = vmatprep.subr.mxu0 0.0
        %295 = vmatpush2.msra.mxu0 0.0
        %296 = vmatprep.subr.mxu0 0.0
        %297 = vmatpush2.msra.mxu0 0.0
        %298 = vmatprep.subr.mxu0 0.0
        %299 = vmatpush2.msra.mxu0 0.0
        %300 = vmatprep.subr.mxu0 0.0
        %301 = vmatpush2.msra.mxu0 0.0
        %302 = vmatprep.subr.mxu0 0.0
        %303 = vmatpush2.msra.mxu0 0.0
        %304 = vmatprep.subr.mxu0 0.0
        %305 = vmatpush2.msra.mxu0 0.0
        %306 = vmatprep.subr.mxu0 0.0
        %307 = vmatpush2.msra.mxu0 0.0
        %308 = vmatprep.subr.mxu0 0.0
        %309 = vmatpush2.msra.mxu0 0.0
        %310 = vmatprep.subr.mxu0 0.0
        %311 = vmatpush2.msra.mxu0 0.0
        %312 = vmatprep.mubr.f32.mxu0 0.0
        %313 = vmatmul.mubr.f32.gmra.mxu0 %v201
        %v314 = vpop.f32.mrf.mxu0
        %v315 = vadd.f32 %v198, %v314
        %v316 = vpop.f32.mrf.mxu0
        %317 = vmatprep.mubr.f32.mxu0 0.0
        %318 = vmatmul.mubr.f32.gmra.mxu0 %v204
        %v319 = vpop.f32.mrf.mxu0
        %v320 = vadd.f32 %v198, %v319
        %v321 = vpop.f32.mrf.mxu0
        %322 = vmatprep.mubr.f32.mxu0 0.0
        %323 = vmatmul.mubr.f32.gmra.mxu0 %v207
        %v324 = vpop.f32.mrf.mxu0
        %v325 = vadd.f32 %v198, %v324
        %v326 = vpop.f32.mrf.mxu0
        %327 = vmatprep.mubr.f32.mxu0 0.0
        %328 = vmatmul.mubr.f32.gmra.mxu0 %v210
        %v329 = vpop.f32.mrf.mxu0
        %v330 = vadd.f32 %v198, %v329
        %v331 = vpop.f32.mrf.mxu0
        %332 = vmatprep.mubr.f32.mxu0 0.0
        %333 = vmatmul.mubr.f32.gmra.mxu0 %v213
        %v334 = vpop.f32.mrf.mxu0
        %v335 = vadd.f32 %v198, %v334
        %v336 = vpop.f32.mrf.mxu0
        %337 = vmatprep.mubr.f32.mxu0 0.0
        %338 = vmatmul.mubr.f32.gmra.mxu0 %v216
        %v339 = vpop.f32.mrf.mxu0
        %v340 = vadd.f32 %v198, %v339
        %v341 = vpop.f32.mrf.mxu0
        %342 = vmatprep.mubr.f32.mxu0 0.0
        %343 = vmatmul.mubr.f32.gmra.mxu0 %v219
        %v344 = vpop.f32.mrf.mxu0
        %v345 = vadd.f32 %v198, %v344
        %v346 = vpop.f32.mrf.mxu0
        %347 = vmatprep.mubr.f32.mxu0 0.0
        %348 = vmatmul.mubr.f32.gmra.mxu0 %v222
        %v349 = vpop.f32.mrf.mxu0
        %v350 = vadd.f32 %v198, %v349
        %v351 = vpop.f32.mrf.mxu0
        %352 = vmatprep.mubr.f32.mxu0 0.0
        %353 = vmatmul.mubr.f32.gmra.mxu0 %v225
        %v354 = vpop.f32.mrf.mxu0
        %v355 = vadd.f32 %v198, %v354
        %v356 = vpop.f32.mrf.mxu0
        %357 = vmatprep.mubr.f32.mxu0 0.0
        %358 = vmatmul.mubr.f32.gmra.mxu0 %v228
        %v359 = vpop.f32.mrf.mxu0
        %v360 = vadd.f32 %v198, %v359
        %v361 = vpop.f32.mrf.mxu0
        %362 = vmatprep.mubr.f32.mxu0 0.0
        %363 = vmatmul.mubr.f32.gmra.mxu0 %v231
        %v364 = vpop.f32.mrf.mxu0
        %v365 = vadd.f32 %v198, %v364
        %v366 = vpop.f32.mrf.mxu0
        %367 = vmatprep.mubr.f32.mxu0 0.0
        %368 = vmatmul.mubr.f32.gmra.mxu0 %v234
        %v369 = vpop.f32.mrf.mxu0
        %v370 = vadd.f32 %v198, %v369
        %v371 = vpop.f32.mrf.mxu0
        %372 = vmatprep.mubr.f32.mxu0 0.0
        %373 = vmatmul.mubr.f32.gmra.mxu0 %v237
        %v374 = vpop.f32.mrf.mxu0
        %v375 = vadd.f32 %v198, %v374
        %v376 = vpop.f32.mrf.mxu0
        %377 = vmatprep.mubr.f32.mxu0 0.0
        %378 = vmatmul.mubr.f32.gmra.mxu0 %v240
        %v379 = vpop.f32.mrf.mxu0
        %v380 = vadd.f32 %v198, %v379
        %v381 = vpop.f32.mrf.mxu0
        %382 = vmatprep.mubr.f32.mxu0 0.0
        %383 = vmatmul.mubr.f32.gmra.mxu0 %v243
        %v384 = vpop.f32.mrf.mxu0
        %v385 = vadd.f32 %v198, %v384
        %v386 = vpop.f32.mrf.mxu0
        %387 = vmatprep.mubr.f32.mxu0 0.0
        %388 = vmatmul.mubr.f32.gmra.mxu0 %v246
        %v389 = vpop.f32.mrf.mxu0
        %v390 = vadd.f32 %v198, %v389
        %v391 = vpop.f32.mrf.mxu0
        %392 = vdwg.mxu0
        %v393 = vmax.f32 %v315, 0.0
        %v394 = vmax.f32 %v320, 0.0
        %v395 = vmax.f32 %v325, 0.0
        %v396 = vmax.f32 %v330, 0.0
        %v397 = vmax.f32 %v335, 0.0
        %v398 = vmax.f32 %v340, 0.0
        %v399 = vmax.f32 %v345, 0.0
        %v400 = vmax.f32 %v350, 0.0
        %v401 = vmax.f32 %v355, 0.0
        %v402 = vmax.f32 %v360, 0.0
        %v403 = vmax.f32 %v365, 0.0
        %v404 = vmax.f32 %v370, 0.0
        %v405 = vmax.f32 %v375, 0.0
        %v406 = vmax.f32 %v380, 0.0
        %v407 = vmax.f32 %v385, 0.0
        %v408 = vmax.f32 %v390, 0.0
        %v409 = vld [vmem:[%s1 + $0x40] sm:$0xff]
        %v410 = vld [vmem:[%s1 + $0x48] sm:$0xff]
        %v411 = vld [vmem:[%s1 + $0x50] sm:$0xff]
        %v412 = vld [vmem:[%s1 + $0x58] sm:$0xff]
        %v413 = vld [vmem:[%s1 + $0x60] sm:$0xff]
        %v414 = vld [vmem:[%s1 + $0x68] sm:$0xff]
        %v415 = vld [vmem:[%s1 + $0x70] sm:$0xff]
        %v416 = vld [vmem:[%s1 + $0x78] sm:$0xff]
        %v417 = vld [vmem:[%s1 + $0xb0] sm:$0x1]
        %v418 = vlaneseq
        %v419 = vshrl.u32 %v418, 7
        %v420 = vsub.s32 0, %v419
        %v421 = vrot.slane %v417, %v420
        %v423 = vsel %vm199, %v393, 0
        %v426 = vsel %vm199, %v394, 0
        %v429 = vsel %vm199, %v395, 0
        %v432 = vsel %vm199, %v396, 0
        %v435 = vsel %vm199, %v397, 0
        %v438 = vsel %vm199, %v398, 0
        %v441 = vsel %vm199, %v399, 0
        %v444 = vsel %vm199, %v400, 0
        %v447 = vsel %vm199, %v401, 0
        %v450 = vsel %vm199, %v402, 0
        %v453 = vsel %vm199, %v403, 0
        %v456 = vsel %vm199, %v404, 0
        %v459 = vsel %vm199, %v405, 0
        %v462 = vsel %vm199, %v406, 0
        %v465 = vsel %vm199, %v407, 0
        %v468 = vsel %vm199, %v408, 0
        %470 = vmatprep.subr.mxu0 0.0
        %471 = vmatpush1.msra.mxu0 0.0
        %472 = vmatprep.subr.mxu0 0.0
        %473 = vmatpush1.msra.mxu0 0.0
        %474 = vmatprep.subr.mxu0 0.0
        %475 = vmatpush1.msra.mxu0 0.0
        %476 = vmatprep.subr.mxu0 0.0
        %477 = vmatpush1.msra.mxu0 0.0
        %478 = vmatprep.subr.mxu0 0.0
        %479 = vmatpush1.msra.mxu0 0.0
        %480 = vmatprep.subr.mxu0 0.0
        %481 = vmatpush1.msra.mxu0 0.0
        %482 = vmatprep.subr.mxu0 0.0
        %483 = vmatpush1.msra.mxu0 0.0
        %484 = vmatprep.subr.mxu0 0.0
        %485 = vmatpush1.msra.mxu0 0.0
        %486 = vmatprep.subr.mxu0 0.0
        %487 = vmatpush1.msra.mxu0 %v416
        %488 = vmatprep.subr.mxu0 0.0
        %489 = vmatpush1.msra.mxu0 %v415
        %490 = vmatprep.subr.mxu0 0.0
        %491 = vmatpush1.msra.mxu0 %v414
        %492 = vmatprep.subr.mxu0 0.0
        %493 = vmatpush1.msra.mxu0 %v413
        %494 = vmatprep.subr.mxu0 0.0
        %495 = vmatpush1.msra.mxu0 %v412
        %496 = vmatprep.subr.mxu0 0.0
        %497 = vmatpush1.msra.mxu0 %v411
        %498 = vmatprep.subr.mxu0 0.0
        %499 = vmatpush1.msra.mxu0 %v410
        %500 = vmatprep.subr.mxu0 0.0
        %501 = vmatpush1.msra.mxu0 %v409
        %502 = vmatprep.subr.mxu0 0.0
        %503 = vmatpush2.msra.mxu0 0.0
        %504 = vmatprep.subr.mxu0 0.0
        %505 = vmatpush2.msra.mxu0 0.0
        %506 = vmatprep.subr.mxu0 0.0
        %507 = vmatpush2.msra.mxu0 0.0
        %508 = vmatprep.subr.mxu0 0.0
        %509 = vmatpush2.msra.mxu0 0.0
        %510 = vmatprep.subr.mxu0 0.0
        %511 = vmatpush2.msra.mxu0 0.0
        %512 = vmatprep.subr.mxu0 0.0
        %513 = vmatpush2.msra.mxu0 0.0
        %514 = vmatprep.subr.mxu0 0.0
        %515 = vmatpush2.msra.mxu0 0.0
        %516 = vmatprep.subr.mxu0 0.0
        %517 = vmatpush2.msra.mxu0 0.0
        %518 = vmatprep.subr.mxu0 0.0
        %519 = vmatpush2.msra.mxu0 0.0
        %520 = vmatprep.subr.mxu0 0.0
        %521 = vmatpush2.msra.mxu0 0.0
        %522 = vmatprep.subr.mxu0 0.0
        %523 = vmatpush2.msra.mxu0 0.0
        %524 = vmatprep.subr.mxu0 0.0
        %525 = vmatpush2.msra.mxu0 0.0
        %526 = vmatprep.subr.mxu0 0.0
        %527 = vmatpush2.msra.mxu0 0.0
        %528 = vmatprep.subr.mxu0 0.0
        %529 = vmatpush2.msra.mxu0 0.0
        %530 = vmatprep.subr.mxu0 0.0
        %531 = vmatpush2.msra.mxu0 0.0
        %532 = vmatprep.subr.mxu0 0.0
        %533 = vmatpush2.msra.mxu0 0.0
        %534 = vmatprep.mubr.f32.mxu0 0.0
        %535 = vmatmul.mubr.f32.gmra.mxu0 %v423
        %v536 = vpop.f32.mrf.mxu0
        %v537 = vadd.f32 %v421, %v536
        %v538 = vpop.f32.mrf.mxu0
        %539 = vmatprep.mubr.f32.mxu0 0.0
        %540 = vmatmul.mubr.f32.gmra.mxu0 %v426
        %v541 = vpop.f32.mrf.mxu0
        %v542 = vadd.f32 %v421, %v541
        %v543 = vpop.f32.mrf.mxu0
        %544 = vmatprep.mubr.f32.mxu0 0.0
        %545 = vmatmul.mubr.f32.gmra.mxu0 %v429
        %v546 = vpop.f32.mrf.mxu0
        %v547 = vadd.f32 %v421, %v546
        %v548 = vpop.f32.mrf.mxu0
        %549 = vmatprep.mubr.f32.mxu0 0.0
        %550 = vmatmul.mubr.f32.gmra.mxu0 %v432
        %v551 = vpop.f32.mrf.mxu0
        %v552 = vadd.f32 %v421, %v551
        %v553 = vpop.f32.mrf.mxu0
        %554 = vmatprep.mubr.f32.mxu0 0.0
        %555 = vmatmul.mubr.f32.gmra.mxu0 %v435
        %v556 = vpop.f32.mrf.mxu0
        %v557 = vadd.f32 %v421, %v556
        %v558 = vpop.f32.mrf.mxu0
        %559 = vmatprep.mubr.f32.mxu0 0.0
        %560 = vmatmul.mubr.f32.gmra.mxu0 %v438
        %v561 = vpop.f32.mrf.mxu0
        %v562 = vadd.f32 %v421, %v561
        %v563 = vpop.f32.mrf.mxu0
        %564 = vmatprep.mubr.f32.mxu0 0.0
        %565 = vmatmul.mubr.f32.gmra.mxu0 %v441
        %v566 = vpop.f32.mrf.mxu0
        %v567 = vadd.f32 %v421, %v566
        %v568 = vpop.f32.mrf.mxu0
        %569 = vmatprep.mubr.f32.mxu0 0.0
        %570 = vmatmul.mubr.f32.gmra.mxu0 %v444
        %v571 = vpop.f32.mrf.mxu0
        %v572 = vadd.f32 %v421, %v571
        %v573 = vpop.f32.mrf.mxu0
        %574 = vmatprep.mubr.f32.mxu0 0.0
        %575 = vmatmul.mubr.f32.gmra.mxu0 %v447
        %v576 = vpop.f32.mrf.mxu0
        %v577 = vadd.f32 %v421, %v576
        %v578 = vpop.f32.mrf.mxu0
        %579 = vmatprep.mubr.f32.mxu0 0.0
        %580 = vmatmul.mubr.f32.gmra.mxu0 %v450
        %v581 = vpop.f32.mrf.mxu0
        %v582 = vadd.f32 %v421, %v581
        %v583 = vpop.f32.mrf.mxu0
        %584 = vmatprep.mubr.f32.mxu0 0.0
        %585 = vmatmul.mubr.f32.gmra.mxu0 %v453
        %v586 = vpop.f32.mrf.mxu0
        %v587 = vadd.f32 %v421, %v586
        %v588 = vpop.f32.mrf.mxu0
        %589 = vmatprep.mubr.f32.mxu0 0.0
        %590 = vmatmul.mubr.f32.gmra.mxu0 %v456
        %v591 = vpop.f32.mrf.mxu0
        %v592 = vadd.f32 %v421, %v591
        %v593 = vpop.f32.mrf.mxu0
        %594 = vmatprep.mubr.f32.mxu0 0.0
        %595 = vmatmul.mubr.f32.gmra.mxu0 %v459
        %v596 = vpop.f32.mrf.mxu0
        %v597 = vadd.f32 %v421, %v596
        %v598 = vpop.f32.mrf.mxu0
        %599 = vmatprep.mubr.f32.mxu0 0.0
        %600 = vmatmul.mubr.f32.gmra.mxu0 %v462
        %v601 = vpop.f32.mrf.mxu0
        %v602 = vadd.f32 %v421, %v601
        %v603 = vpop.f32.mrf.mxu0
        %604 = vmatprep.mubr.f32.mxu0 0.0
        %605 = vmatmul.mubr.f32.gmra.mxu0 %v465
        %v606 = vpop.f32.mrf.mxu0
        %v607 = vadd.f32 %v421, %v606
        %v608 = vpop.f32.mrf.mxu0
        %609 = vmatprep.mubr.f32.mxu0 0.0
        %610 = vmatmul.mubr.f32.gmra.mxu0 %v468
        %v611 = vpop.f32.mrf.mxu0
        %v612 = vadd.f32 %v421, %v611
        %v613 = vpop.f32.mrf.mxu0
        %614 = vdwg.mxu0
        %v615 = vmax.f32 %v537, 0.0
        %v616 = vmax.f32 %v542, 0.0
        %v617 = vmax.f32 %v547, 0.0
        %v618 = vmax.f32 %v552, 0.0
        %v619 = vmax.f32 %v557, 0.0
        %v620 = vmax.f32 %v562, 0.0
        %v621 = vmax.f32 %v567, 0.0
        %v622 = vmax.f32 %v572, 0.0
        %v623 = vmax.f32 %v577, 0.0
        %v624 = vmax.f32 %v582, 0.0
        %v625 = vmax.f32 %v587, 0.0
        %v626 = vmax.f32 %v592, 0.0
        %v627 = vmax.f32 %v597, 0.0
        %v628 = vmax.f32 %v602, 0.0
        %v629 = vmax.f32 %v607, 0.0
        %v630 = vmax.f32 %v612, 0.0
        %v631 = vld [vmem:[%s1 + $0x80] sm:$0xff]
        %v632 = vld [vmem:[%s1 + $0x88] sm:$0xff]
        %v633 = vld [vmem:[%s1 + $0x90] sm:$0xff]
        %v634 = vld [vmem:[%s1 + $0x98] sm:$0xff]
        %v635 = vld [vmem:[%s1 + $0xc0] sm:$0x1]
        %v636 = vlaneseq
        %v637 = vshrl.u32 %v636, 7
        %v638 = vsub.s32 0, %v637
        %v639 = vrot.slane %v635, %v638
        %vm640 = vcmask 261120
        %v642 = vsel %vm640, %v615, 0
        %v645 = vsel %vm640, %v616, 0
        %v648 = vsel %vm640, %v617, 0
        %v651 = vsel %vm640, %v618, 0
        %v654 = vsel %vm640, %v619, 0
        %v657 = vsel %vm640, %v620, 0
        %v660 = vsel %vm640, %v621, 0
        %v663 = vsel %vm640, %v622, 0
        %v666 = vsel %vm640, %v623, 0
        %v669 = vsel %vm640, %v624, 0
        %v672 = vsel %vm640, %v625, 0
        %v675 = vsel %vm640, %v626, 0
        %v678 = vsel %vm640, %v627, 0
        %v681 = vsel %vm640, %v628, 0
        %v684 = vsel %vm640, %v629, 0
        %v687 = vsel %vm640, %v630, 0
        %689 = vmatprep.subr.mxu0 0.0
        %690 = vmatpush1.msra.mxu0 0.0
        %691 = vmatprep.subr.mxu0 0.0
        %692 = vmatpush1.msra.mxu0 0.0
        %693 = vmatprep.subr.mxu0 0.0
        %694 = vmatpush1.msra.mxu0 0.0
        %695 = vmatprep.subr.mxu0 0.0
        %696 = vmatpush1.msra.mxu0 0.0
        %697 = vmatprep.subr.mxu0 0.0
        %698 = vmatpush1.msra.mxu0 0.0
        %699 = vmatprep.subr.mxu0 0.0
        %700 = vmatpush1.msra.mxu0 0.0
        %701 = vmatprep.subr.mxu0 0.0
        %702 = vmatpush1.msra.mxu0 0.0
        %703 = vmatprep.subr.mxu0 0.0
        %704 = vmatpush1.msra.mxu0 0.0
        %705 = vmatprep.subr.mxu0 0.0
        %706 = vmatpush1.msra.mxu0 0.0
        %707 = vmatprep.subr.mxu0 0.0
        %708 = vmatpush1.msra.mxu0 0.0
        %709 = vmatprep.subr.mxu0 0.0
        %710 = vmatpush1.msra.mxu0 0.0
        %711 = vmatprep.subr.mxu0 0.0
        %712 = vmatpush1.msra.mxu0 0.0
        %713 = vmatprep.subr.mxu0 0.0
        %714 = vmatpush1.msra.mxu0 %v634
        %715 = vmatprep.subr.mxu0 0.0
        %716 = vmatpush1.msra.mxu0 %v633
        %717 = vmatprep.subr.mxu0 0.0
        %718 = vmatpush1.msra.mxu0 %v632
        %719 = vmatprep.subr.mxu0 0.0
        %720 = vmatpush1.msra.mxu0 %v631
        %721 = vmatprep.subr.mxu0 0.0
        %722 = vmatpush2.msra.mxu0 0.0
        %723 = vmatprep.subr.mxu0 0.0
        %724 = vmatpush2.msra.mxu0 0.0
        %725 = vmatprep.subr.mxu0 0.0
        %726 = vmatpush2.msra.mxu0 0.0
        %727 = vmatprep.subr.mxu0 0.0
        %728 = vmatpush2.msra.mxu0 0.0
        %729 = vmatprep.subr.mxu0 0.0
        %730 = vmatpush2.msra.mxu0 0.0
        %731 = vmatprep.subr.mxu0 0.0
        %732 = vmatpush2.msra.mxu0 0.0
        %733 = vmatprep.subr.mxu0 0.0
        %734 = vmatpush2.msra.mxu0 0.0
        %735 = vmatprep.subr.mxu0 0.0
        %736 = vmatpush2.msra.mxu0 0.0
        %737 = vmatprep.subr.mxu0 0.0
        %738 = vmatpush2.msra.mxu0 0.0
        %739 = vmatprep.subr.mxu0 0.0
        %740 = vmatpush2.msra.mxu0 0.0
        %741 = vmatprep.subr.mxu0 0.0
        %742 = vmatpush2.msra.mxu0 0.0
        %743 = vmatprep.subr.mxu0 0.0
        %744 = vmatpush2.msra.mxu0 0.0
        %745 = vmatprep.subr.mxu0 0.0
        %746 = vmatpush2.msra.mxu0 0.0
        %747 = vmatprep.subr.mxu0 0.0
        %748 = vmatpush2.msra.mxu0 0.0
        %749 = vmatprep.subr.mxu0 0.0
        %750 = vmatpush2.msra.mxu0 0.0
        %751 = vmatprep.subr.mxu0 0.0
        %752 = vmatpush2.msra.mxu0 0.0
        %753 = vmatprep.mubr.f32.mxu0 0.0
        %754 = vmatmul.mubr.f32.gmra.mxu0 %v642
        %v755 = vpop.f32.mrf.mxu0
        %v756 = vadd.f32 %v639, %v755
        %v757 = vpop.f32.mrf.mxu0
        %758 = vmatprep.mubr.f32.mxu0 0.0
        %759 = vmatmul.mubr.f32.gmra.mxu0 %v645
        %v760 = vpop.f32.mrf.mxu0
        %v761 = vadd.f32 %v639, %v760
        %v762 = vpop.f32.mrf.mxu0
        %763 = vmatprep.mubr.f32.mxu0 0.0
        %764 = vmatmul.mubr.f32.gmra.mxu0 %v648
        %v765 = vpop.f32.mrf.mxu0
        %v766 = vadd.f32 %v639, %v765
        %v767 = vpop.f32.mrf.mxu0
        %768 = vmatprep.mubr.f32.mxu0 0.0
        %769 = vmatmul.mubr.f32.gmra.mxu0 %v651
        %v770 = vpop.f32.mrf.mxu0
        %v771 = vadd.f32 %v639, %v770
        %v772 = vpop.f32.mrf.mxu0
        %773 = vmatprep.mubr.f32.mxu0 0.0
        %774 = vmatmul.mubr.f32.gmra.mxu0 %v654
        %v775 = vpop.f32.mrf.mxu0
        %v776 = vadd.f32 %v639, %v775
        %v777 = vpop.f32.mrf.mxu0
        %778 = vmatprep.mubr.f32.mxu0 0.0
        %779 = vmatmul.mubr.f32.gmra.mxu0 %v657
        %v780 = vpop.f32.mrf.mxu0
        %v781 = vadd.f32 %v639, %v780
        %v782 = vpop.f32.mrf.mxu0
        %783 = vmatprep.mubr.f32.mxu0 0.0
        %784 = vmatmul.mubr.f32.gmra.mxu0 %v660
        %v785 = vpop.f32.mrf.mxu0
        %v786 = vadd.f32 %v639, %v785
        %v787 = vpop.f32.mrf.mxu0
        %788 = vmatprep.mubr.f32.mxu0 0.0
        %789 = vmatmul.mubr.f32.gmra.mxu0 %v663
        %v790 = vpop.f32.mrf.mxu0
        %v791 = vadd.f32 %v639, %v790
        %v792 = vpop.f32.mrf.mxu0
        %793 = vmatprep.mubr.f32.mxu0 0.0
        %794 = vmatmul.mubr.f32.gmra.mxu0 %v666
        %v795 = vpop.f32.mrf.mxu0
        %v796 = vadd.f32 %v639, %v795
        %v797 = vpop.f32.mrf.mxu0
        %798 = vmatprep.mubr.f32.mxu0 0.0
        %799 = vmatmul.mubr.f32.gmra.mxu0 %v669
        %v800 = vpop.f32.mrf.mxu0
        %v801 = vadd.f32 %v639, %v800
        %v802 = vpop.f32.mrf.mxu0
        %803 = vmatprep.mubr.f32.mxu0 0.0
        %804 = vmatmul.mubr.f32.gmra.mxu0 %v672
        %v805 = vpop.f32.mrf.mxu0
        %v806 = vadd.f32 %v639, %v805
        %v807 = vpop.f32.mrf.mxu0
        %808 = vmatprep.mubr.f32.mxu0 0.0
        %809 = vmatmul.mubr.f32.gmra.mxu0 %v675
        %v810 = vpop.f32.mrf.mxu0
        %v811 = vadd.f32 %v639, %v810
        %v812 = vpop.f32.mrf.mxu0
        %813 = vmatprep.mubr.f32.mxu0 0.0
        %814 = vmatmul.mubr.f32.gmra.mxu0 %v678
        %v815 = vpop.f32.mrf.mxu0
        %v816 = vadd.f32 %v639, %v815
        %v817 = vpop.f32.mrf.mxu0
        %818 = vmatprep.mubr.f32.mxu0 0.0
        %819 = vmatmul.mubr.f32.gmra.mxu0 %v681
        %v820 = vpop.f32.mrf.mxu0
        %v821 = vadd.f32 %v639, %v820
        %v822 = vpop.f32.mrf.mxu0
        %823 = vmatprep.mubr.f32.mxu0 0.0
        %824 = vmatmul.mubr.f32.gmra.mxu0 %v684
        %v825 = vpop.f32.mrf.mxu0
        %v826 = vadd.f32 %v639, %v825
        %v827 = vpop.f32.mrf.mxu0
        %828 = vmatprep.mubr.f32.mxu0 0.0
        %829 = vmatmul.mubr.f32.gmra.mxu0 %v687
        %v830 = vpop.f32.mrf.mxu0
        %v831 = vadd.f32 %v639, %v830
        %v832 = vpop.f32.mrf.mxu0
        %833 = vdwg.mxu0
        %v834 = vmax.f32 %v756, 0.0
        %v835 = vmax.f32 %v761, 0.0
        %v836 = vmax.f32 %v766, 0.0
        %v837 = vmax.f32 %v771, 0.0
        %v838 = vmax.f32 %v776, 0.0
        %v839 = vmax.f32 %v781, 0.0
        %v840 = vmax.f32 %v786, 0.0
        %v841 = vmax.f32 %v791, 0.0
        %v842 = vmax.f32 %v796, 0.0
        %v843 = vmax.f32 %v801, 0.0
        %v844 = vmax.f32 %v806, 0.0
        %v845 = vmax.f32 %v811, 0.0
        %v846 = vmax.f32 %v816, 0.0
        %v847 = vmax.f32 %v821, 0.0
        %v848 = vmax.f32 %v826, 0.0
        %v849 = vmax.f32 %v831, 0.0
        %v850 = vld [vmem:[%s2] sm:$0x1]
        %v851 = vld [vmem:[%s2 + $0x1] sm:$0x1]
        %853 = vset.pattern.permute.xlu0 0
        %854 = vperm.xlu0 %853, %v851
        %v855 = vpop.permute.xlu0 %854
        %vm857 = vcmask 130048
        %v859 = vsel %vm857, %v850, 0
        %v862 = vsel %vm857, %v834, 0
        %v865 = vsel %vm857, %v835, 0
        %v868 = vsel %vm857, %v836, 0
        %v871 = vsel %vm857, %v837, 0
        %v874 = vsel %vm857, %v838, 0
        %v877 = vsel %vm857, %v839, 0
        %v880 = vsel %vm857, %v840, 0
        %v883 = vsel %vm857, %v841, 0
        %v886 = vsel %vm857, %v842, 0
        %v889 = vsel %vm857, %v843, 0
        %v892 = vsel %vm857, %v844, 0
        %v895 = vsel %vm857, %v845, 0
        %v898 = vsel %vm857, %v846, 0
        %v901 = vsel %vm857, %v847, 0
        %v904 = vsel %vm857, %v848, 0
        %v907 = vsel %vm857, %v849, 0
        %909 = vmatprep.subr.mxu0 0.0
        %910 = vmatpush1.xpose.msra.mxu0 %v907
        %911 = vmatprep.subr.mxu0 0.0
        %912 = vmatpush1.xpose.msra.mxu0 %v904
        %913 = vmatprep.subr.mxu0 0.0
        %914 = vmatpush1.xpose.msra.mxu0 %v901
        %915 = vmatprep.subr.mxu0 0.0
        %916 = vmatpush1.xpose.msra.mxu0 %v898
        %917 = vmatprep.subr.mxu0 0.0
        %918 = vmatpush1.xpose.msra.mxu0 %v895
        %919 = vmatprep.subr.mxu0 0.0
        %920 = vmatpush1.xpose.msra.mxu0 %v892
        %921 = vmatprep.subr.mxu0 0.0
        %922 = vmatpush1.xpose.msra.mxu0 %v889
        %923 = vmatprep.subr.mxu0 0.0
        %924 = vmatpush1.xpose.msra.mxu0 %v886
        %925 = vmatprep.subr.mxu0 0.0
        %926 = vmatpush1.xpose.msra.mxu0 %v883
        %927 = vmatprep.subr.mxu0 0.0
        %928 = vmatpush1.xpose.msra.mxu0 %v880
        %929 = vmatprep.subr.mxu0 0.0
        %930 = vmatpush1.xpose.msra.mxu0 %v877
        %931 = vmatprep.subr.mxu0 0.0
        %932 = vmatpush1.xpose.msra.mxu0 %v874
        %933 = vmatprep.subr.mxu0 0.0
        %934 = vmatpush1.xpose.msra.mxu0 %v871
        %935 = vmatprep.subr.mxu0 0.0
        %936 = vmatpush1.xpose.msra.mxu0 %v868
        %937 = vmatprep.subr.mxu0 0.0
        %938 = vmatpush1.xpose.msra.mxu0 %v865
        %939 = vmatprep.subr.mxu0 0.0
        %940 = vmatpush1.xpose.msra.mxu0 %v862
        %941 = vmatprep.subr.mxu0 0.0
        %942 = vmatpush2.xpose.msra.mxu0 0.0
        %943 = vmatprep.subr.mxu0 0.0
        %944 = vmatpush2.xpose.msra.mxu0 0.0
        %945 = vmatprep.subr.mxu0 0.0
        %946 = vmatpush2.xpose.msra.mxu0 0.0
        %947 = vmatprep.subr.mxu0 0.0
        %948 = vmatpush2.xpose.msra.mxu0 0.0
        %949 = vmatprep.subr.mxu0 0.0
        %950 = vmatpush2.xpose.msra.mxu0 0.0
        %951 = vmatprep.subr.mxu0 0.0
        %952 = vmatpush2.xpose.msra.mxu0 0.0
        %953 = vmatprep.subr.mxu0 0.0
        %954 = vmatpush2.xpose.msra.mxu0 0.0
        %955 = vmatprep.subr.mxu0 0.0
        %956 = vmatpush2.xpose.msra.mxu0 0.0
        %957 = vmatprep.subr.mxu0 0.0
        %958 = vmatpush2.xpose.msra.mxu0 0.0
        %959 = vmatprep.subr.mxu0 0.0
        %960 = vmatpush2.xpose.msra.mxu0 0.0
        %961 = vmatprep.subr.mxu0 0.0
        %962 = vmatpush2.xpose.msra.mxu0 0.0
        %963 = vmatprep.subr.mxu0 0.0
        %964 = vmatpush2.xpose.msra.mxu0 0.0
        %965 = vmatprep.subr.mxu0 0.0
        %966 = vmatpush2.xpose.msra.mxu0 0.0
        %967 = vmatprep.subr.mxu0 0.0
        %968 = vmatpush2.xpose.msra.mxu0 0.0
        %969 = vmatprep.subr.mxu0 0.0
        %970 = vmatpush2.xpose.msra.mxu0 0.0
        %971 = vmatprep.subr.mxu0 0.0
        %972 = vmatpush2.xpose.msra.mxu0 0.0
        %973 = vmatprep.mubr.f32.mxu0 0.0
        %974 = vmatmul.mubr.f32.gmra.mxu0 %v859
        %v975 = vpop.f32.mrf.mxu0
        %v976 = vadd.f32 %v855, %v975
        %v977 = vpop.f32.mrf.mxu0
        %978 = vdwg.mxu0
        %979 = vst [vmem:[%s163] sm:$0x1] %v976
        %s980 = sand.u32 %s93, 1
        %s981 = scalar_lea.sflag [#allocation3], %s980
        %s982 = sand.u32 %s93, 1
        %s983 = scalar_lea.vmem [#allocation2], %s982
        // Predicated region
        $region33: #{tpu_custom_call.1} parent=31 // pred_check
          %p984 = pneg %p103
        $region34: #{tpu_custom_call.1} parent=31 // pred_check_branch
          %986 = sbr.rel (%p984) target = $region36
        $region35: #{tpu_custom_call.1} parent=31 // pred_region
          %s988 = ssub.s32 16, 16
          %989 = vsyncadd %s981, %s988
          %s990 = smul.addr %s17, 16
          %s991 = scalar_lea.hbm %s3, %s990
          %s993 = sshll.u32 %s983, 4
          %s994 = int_to_ptr.vmem [resolvable:$true] %s993
          %996 = dma.vmem_to_hbm [thread:$0]  %s994, 16, %s991, %s981
        $region36: #{tpu_custom_call.1} parent=31 // pred_fallthru
          _
      $region32: #{tpu_custom_call.1} parent=5 // pred_fallthru
        _
      %p997 = scmp.le.s32.totalorder 2, %s12
      // Predicated region
      $region37: #{tpu_custom_call.1} parent=5 // pred_check
        %p998 = pneg %p997
      $region38: #{tpu_custom_call.1} parent=5 // pred_check_branch
        %1000 = sbr.rel (%p998) target = $region40
      $region39: #{tpu_custom_call.1} parent=5 // pred_region
        %s1001 = ssub.s32 %s12, 2
        // Predicated region
        $region41: #{tpu_custom_call.1} parent=39 // pred_check
          %p1002 = pneg %p109
        $region42: #{tpu_custom_call.1} parent=39 // pred_check_branch
          %1004 = sbr.rel (%p1002) target = $region44
        $region43: #{tpu_custom_call.1} parent=39 // pred_region
          %s1005 = sand.u32 %s94, 1
          %s1006 = scalar_lea.sflag [#allocation3], %s1005
          %s1007 = sand.u32 %s94, 1
          %s1008 = scalar_lea.vmem [#allocation2], %s1007
          %1009 = dma.done %s1006, 16
        $region44: #{tpu_custom_call.1} parent=39 // pred_fallthru
          _
      $region40: #{tpu_custom_call.1} parent=5 // pred_fallthru
        _
    $region6: #{tpu_custom_call.1} parent=1 // loop_footer
      %s16 = sadd.s32 1, %s12
    $region7: #{tpu_custom_call.1} parent=1 // loop_footer_branch
      %11 = sbr.rel target = $region3
    $region8: #{tpu_custom_call.1} parent=1 // loop_exit
      _
    %1010 = vsyncpa [#allocation3], 1
    %s1011 = scalar_lea.sflag [#allocation3], 1
    %1012 = vsyncpa %s1011, 1

</llo_original>
